<compile_context>
chip_gen: v7x
topology: tpu7x:2x2x1
jax: 0.10.0
libtpu: 0.0.40
codegen_flags: <defaults>
</compile_context>

<pallas_src>
import functools

import numpy as np
import jax
import jax.numpy as jnp
from jax.experimental import pallas as pl
from jax.experimental.pallas import tpu as pltpu

EPS = 1e-5  # BatchNorm2d eps

_COMPILER_PARAMS = pltpu.CompilerParams(
    dimension_semantics=("parallel", "parallel"),
    vmem_limit_bytes=48 * 1024 * 1024,
)


def _round_up(x, m):
    return (x + m - 1) // m * m


def _apply_act(y, act):
    if act == "leaky":
        return jnp.where(y >= 0.0, y, 0.2 * y)
    if act == "relu":
        return jnp.maximum(y, 0.0)
    if act == "tanh":
        return jnp.tanh(y)
    return y


# ---------------------------------------------------------------------------
# Kernel 1: generic single-shot matmul + fused scale/shift + activation
# (used for the tiny-spatial, weight-streaming-bound layers)
# ---------------------------------------------------------------------------
def _mm_epi_kernel(a_ref, b_ref, s_ref, c_ref, o_ref, *, act):
    y = jnp.dot(a_ref[...], b_ref[...], preferred_element_type=jnp.float32)
    y = y * s_ref[...] + c_ref[...]
    o_ref[...] = _apply_act(y, act).astype(o_ref.dtype)


def matmul_epilogue(A, B, s, c, act, out_dtype=jnp.bfloat16):
    """act( (A @ B) * s + c ). A:(M,K) bf16, B:(K,Np) bf16 pre-padded."""
    M, K = A.shape
    K2, Np = B.shape
    assert K == K2, (K, K2)
    tm = 1024 if (M > 1024 and M % 1024 == 0) else M
    assert M % tm == 0
    tn = Np if Np <= 128 else min(Np, 512)
    if Np // tn < 2 and Np >= 256:      # keep >=2 N tiles for 2-TC (v7x) sharding
        tn = Np // 2
    nm, nn = M // tm, Np // tn
    out = pl.pallas_call(
        functools.partial(_mm_epi_kernel, act=act),
        out_shape=jax.ShapeDtypeStruct((M, Np), out_dtype),
        grid_spec=pltpu.PrefetchScalarGridSpec(
            num_scalar_prefetch=0,
            grid=(nm, nn),
            in_specs=[
                pl.BlockSpec((tm, K), lambda i, j: (i, 0)),
                pl.BlockSpec((K, tn), lambda i, j: (0, j)),
                pl.BlockSpec((1, tn), lambda i, j: (0, j)),
                pl.BlockSpec((1, tn), lambda i, j: (0, j)),
            ],
            out_specs=pl.BlockSpec((tm, tn), lambda i, j: (i, j)),
        ),
        compiler_params=_COMPILER_PARAMS,
    )(A.astype(jnp.bfloat16), B, s, c)
    return out


# ---------------------------------------------------------------------------
# Kernel 2: fused Conv2d(k=4,s=2,p=1) with implicit im2col.
# Resident input is the space-to-depth'd padded activation (OH+1, OW+1, 4C);
# the 4 remaining taps (dh,dw in {0,1}) are built in-kernel.
# ---------------------------------------------------------------------------
def _conv_s2d_kernel(x_ref, b_ref, s_ref, c_ref, o_ref, *, R, OW, C4, act):
    i = pl.program_id(1)
    r0 = i * R
    acc = None
    for dh in range(2):
        rows = x_ref[pl.ds(r0 + dh, R), :, :]              # (R, OW+1, 4C)
        for dw in range(2):
            a = rows[:, dw:dw + OW, :].reshape(R * OW, C4)
            t = 2 * dh + dw
            d = jnp.dot(a, b_ref[t * C4:(t + 1) * C4, :],
                        preferred_element_type=jnp.float32)
            acc = d if acc is None else acc + d
    y = acc * s_ref[...] + c_ref[...]
    o_ref[...] = _apply_act(y, act).astype(o_ref.dtype)


def conv2d_fused(x, B, s, c, act, co, out_dtype=jnp.bfloat16):
    # x: (H, W, C) NHWC bf16; B: (16C, Np) bf16 (s2d tap ordering).
    H, W, C = x.shape
    OH, OW = H // 2, W // 2
    assert OW >= 8 and OW % 8 == 0
    Kp, Np = B.shape
    assert Kp == 16 * C
    xp = jnp.pad(x, ((1, 1), (1, 1), (0, 0)))
    xs = xp.reshape(OH + 1, 2, OW + 1, 2, C)
    xs = jnp.transpose(xs, (0, 2, 1, 3, 4)).reshape(OH + 1, OW + 1, 4 * C)

    M = OH * OW
    tn = min(Np, 256)
    R = OH
    while R * OW > 1024 and R % 2 == 0:
        R //= 2
    tm = R * OW
    nm, nn = M // tm, Np // tn

    out = pl.pallas_call(
        functools.partial(_conv_s2d_kernel, R=R, OW=OW, C4=4 * C, act=act),
        out_shape=jax.ShapeDtypeStruct((M, Np), out_dtype),
        grid_spec=pltpu.PrefetchScalarGridSpec(
            num_scalar_prefetch=0,
            grid=(nn, nm),
            in_specs=[
                pl.BlockSpec((OH + 1, OW + 1, 4 * C), lambda j, i: (0, 0, 0)),
                pl.BlockSpec((Kp, tn), lambda j, i: (0, j)),
                pl.BlockSpec((1, tn), lambda j, i: (0, j)),
                pl.BlockSpec((1, tn), lambda j, i: (0, j)),
            ],
            out_specs=pl.BlockSpec((tm, tn), lambda j, i: (i, j)),
        ),
        compiler_params=_COMPILER_PARAMS,
    )(xs, B, s, c)
    return out[:, :co].reshape(OH, OW, co)


# ---------------------------------------------------------------------------
# Kernel 3: fused ConvTranspose2d(k=4,s=2,p=1) over TWO concatenated inputs
# (decoder activation + U-Net skip), implicit 3x3 im2col, all 4 output
# parities as 4*Co output columns (depth-to-space done in XLA afterwards).
# ---------------------------------------------------------------------------
def _convT_cat_kernel(x1_ref, x2_ref, b_ref, s_ref, c_ref, o_ref,
                      *, R, W, C1, C2, act):
    i = pl.program_id(1)
    r0 = i * R
    Ct = C1 + C2
    acc = None
    for p in range(3):
        rows1 = x1_ref[pl.ds(r0 + p, R), :, :]             # (R, W+2, C1)
        rows2 = x2_ref[pl.ds(r0 + p, R), :, :]             # (R, W+2, C2)
        for q in range(3):
            off = (3 * p + q) * Ct
            a1 = rows1[:, q:q + W, :].reshape(R * W, C1)
            d = jnp.dot(a1, b_ref[off:off + C1, :],
                        preferred_element_type=jnp.float32)
            acc = d if acc is None else acc + d
            a2 = rows2[:, q:q + W, :].reshape(R * W, C2)
            acc = acc + jnp.dot(a2, b_ref[off + C1:off + Ct, :],
                                preferred_element_type=jnp.float32)
    y = acc * s_ref[...] + c_ref[...]
    o_ref[...] = _apply_act(y, act).astype(o_ref.dtype)


def convT_cat_fused(x1, x2, B, s, c, act, co, out_dtype=jnp.bfloat16):
    # x1: (H, W, C1), x2: (H, W, C2) bf16; B: (9*(C1+C2), Np) bf16.
    H, W, C1 = x1.shape
    H2, W2, C2 = x2.shape
    assert (H, W) == (H2, W2)
    assert W >= 8 and W % 8 == 0
    Kp, Np = B.shape
    assert Kp == 9 * (C1 + C2)
    xp1 = jnp.pad(x1, ((1, 1), (1, 1), (0, 0)))
    xp2 = jnp.pad(x2, ((1, 1), (1, 1), (0, 0)))

    M = H * W
    tn = min(Np, 256)
    R = H
    while R * W > 1024 and R % 2 == 0:
        R //= 2
    tm = R * W
    nm, nn = M // tm, Np // tn

    out = pl.pallas_call(
        functools.partial(_convT_cat_kernel, R=R, W=W, C1=C1, C2=C2, act=act),
        out_shape=jax.ShapeDtypeStruct((M, Np), out_dtype),
        grid_spec=pltpu.PrefetchScalarGridSpec(
            num_scalar_prefetch=0,
            grid=(nn, nm),
            in_specs=[
                pl.BlockSpec((H + 2, W + 2, C1), lambda j, i: (0, 0, 0)),
                pl.BlockSpec((H + 2, W + 2, C2), lambda j, i: (0, 0, 0)),
                pl.BlockSpec((Kp, tn), lambda j, i: (0, j)),
                pl.BlockSpec((1, tn), lambda j, i: (0, j)),
                pl.BlockSpec((1, tn), lambda j, i: (0, j)),
            ],
            out_specs=pl.BlockSpec((tm, tn), lambda j, i: (i, j)),
        ),
        compiler_params=_COMPILER_PARAMS,
    )(xp1, xp2, B, s, c)
    y = out[:, :4 * co].reshape(H, W, 2, 2, co)
    y = jnp.transpose(y, (0, 2, 1, 3, 4)).reshape(2 * H, 2 * W, co)
    return y


# ---------------------------------------------------------------------------
# Old (generic) paths for the tiny-spatial layers: XLA im2col is a few 100 KiB.
# ---------------------------------------------------------------------------
def conv2d_generic(x, B, s, c, act, co, out_dtype=jnp.bfloat16):
    H, W, C = x.shape
    OH, OW = H // 2, W // 2
    assert B.shape[0] == 16 * C
    xp = jnp.pad(x, ((1, 1), (1, 1), (0, 0)))
    cols = [xp[kh:kh + 2 * OH:2, kw:kw + 2 * OW:2, :]
            for kh in range(4) for kw in range(4)]
    A = jnp.concatenate(cols, axis=-1).reshape(OH * OW, 16 * C)
    y = matmul_epilogue(A, B, s, c, act, out_dtype)
    return y[:, :co].reshape(OH, OW, co)


def convT_generic(x, B, s, c, act, co, out_dtype=jnp.bfloat16):
    H, W, C = x.shape
    assert B.shape[0] == 9 * C
    xq = jnp.pad(x, ((1, 1), (1, 1), (0, 0)))
    cols = [xq[p:p + H, q:q + W, :] for p in range(3) for q in range(3)]
    A = jnp.concatenate(cols, axis=-1).reshape(H * W, 9 * C)
    y = matmul_epilogue(A, B, s, c, act, out_dtype)
    y = y[:, :4 * co].reshape(H, W, 2, 2, co)
    y = jnp.transpose(y, (0, 2, 1, 3, 4)).reshape(2 * H, 2 * W, co)
    return y


# ---------------------------------------------------------------------------
# Weight pre-formatting (done ONCE at init, stored bf16 pre-padded)
# ---------------------------------------------------------------------------
def conv_w_to_mm(w):
    """Conv2d weight (Co,Ci,4,4) -> (16*Ci, Co), rows ordered (kh, kw, ci)."""
    co = w.shape[0]
    return jnp.transpose(w, (2, 3, 1, 0)).reshape(-1, co)


def conv_w_to_mm_s2d(w):
    """Conv2d weight (Co,Ci,4,4) -> (16*Ci, Co) for the s2d fused kernel.

    Row ordering (dh, dw, di, dj, ci) matches the space-to-depth channel
    layout xs[r,c,(2di+dj)*Ci+ci] = xpad[2r+di, 2c+dj, ci]."""
    co, ci = w.shape[0], w.shape[1]
    wt = np.asarray(w, np.float32)
    out = np.zeros((2, 2, 2, 2, ci, co), np.float32)
    for dh in range(2):
        for dw in range(2):
            for di in range(2):
                for dj in range(2):
                    out[dh, dw, di, dj] = wt[:, :, 2 * dh + di, 2 * dw + dj].T
    return out.reshape(16 * ci, co)


def convT_w_to_mm(w):
    """ConvTranspose2d weight (Ci,Co,4,4) -> (9*Ci, 4*Co) fused-parity slab.

    Column block (2a+b)*Co..+Co produces output pixel (2m+a, 2n+b); rows are
    ordered (p, q, ci) over the 3x3 padded-input neighborhood."""
    Ci, Co = w.shape[0], w.shape[1]
    wt = np.transpose(np.asarray(w, np.float32), (2, 3, 0, 1))  # (kh,kw,Ci,Co)
    W9 = np.zeros((3, 3, Ci, 4, Co), np.float32)
    for a in (0, 1):
        for b in (0, 1):
            for dh in (0, 1):
                for dw in (0, 1):
                    W9[a + dh, b + dw, :, 2 * a + b, :] = wt[3 - a - 2 * dh,
                                                             3 - b - 2 * dw]
    return W9.reshape(9 * Ci, 4 * Co)


def _pad_cols(B, Np):
    B = jnp.asarray(B, jnp.float32)
    return jnp.pad(B, ((0, 0), (0, Np - B.shape[1]))).astype(jnp.bfloat16)


def _row(v, Np):
    v = jnp.asarray(v, jnp.float32).reshape(1, -1)
    return jnp.pad(v, ((0, 0), (0, Np - v.shape[1])))


# ---------------------------------------------------------------------------
# Parameters (deterministic synthetic init, shapes from Generator.__init__)
# ---------------------------------------------------------------------------
ENC_CFG = [(3, 64, False), (64, 128, True), (128, 256, True), (256, 512, True),
           (512, 512, True), (512, 512, True), (512, 512, True), (512, 512, False)]
DEC_CFG = [(512, 512), (1024, 512), (1024, 512), (1024, 512),
           (1024, 256), (512, 128), (256, 64)]


def init_params(key, in_hw=256):
    assert in_hw % 256 == 0  # 8 stride-2 downsamples -> 256 is the minimum
    n_keys = 3 * len(ENC_CFG) + 3 * len(DEC_CFG) + 2
    keys = iter(jax.random.split(key, n_keys))
    inv = 1.0 / np.sqrt(1.0 + EPS)  # eval BN: running_var=1, running_mean=0

    enc = []
    hw = in_hw
    for li, (ci, co, bn) in enumerate(ENC_CFG):
        wk, gk, bk = next(keys), next(keys), next(keys)
        w = 0.02 * jax.random.normal(wk, (co, ci, 4, 4), jnp.float32)
        if bn:
            g = 1.0 + 0.1 * jax.random.normal(gk, (co,), jnp.float32)
            beta = 0.1 * jax.random.normal(bk, (co,), jnp.float32)
            scale, shift = g * inv, beta
        else:
            scale = jnp.ones((co,), jnp.float32)
            shift = jnp.zeros((co,), jnp.float32)
        oh = hw // 2
        fused = (li > 0) and (oh >= 8)    # enc1 (C=3) stays on the generic path
        B = conv_w_to_mm_s2d(w) if fused else conv_w_to_mm(w)
        Np = _round_up(co, 128)
        enc.append(dict(B=_pad_cols(B, Np), s=_row(scale, Np), c=_row(shift, Np),
                        co=co, fused=fused))
        hw = oh

    dec = []
    for li, (ci, co) in enumerate(DEC_CFG):
        wk, gk, bk = next(keys), next(keys), next(keys)
        w = 0.02 * jax.random.normal(wk, (ci, co, 4, 4), jnp.float32)
        g = 1.0 + 0.1 * jax.random.normal(gk, (co,), jnp.float32)
        beta = 0.1 * jax.random.normal(bk, (co,), jnp.float32)
        Np = _round_up(4 * co, 128)
        fused = (li >= 1) and (hw >= 8)   # d1 has no skip; d1-d3 are tiny
        dec.append(dict(B=_pad_cols(convT_w_to_mm(w), Np),
                        s=_row(jnp.tile(g * inv, 4), Np),
                        c=_row(jnp.tile(beta, 4), Np),
                        co=co, fused=fused))
        hw *= 2

    wk, bk = next(keys), next(keys)
    wl = 0.02 * jax.random.normal(wk, (128, 3, 4, 4), jnp.float32)
    bl = 0.02 * jax.random.normal(bk, (3,), jnp.float32)
    Np = 128
    last = dict(B=_pad_cols(convT_w_to_mm(wl), Np),
                s=_row(jnp.ones((12,), jnp.float32), Np),
                c=_row(jnp.tile(bl, 4), Np),
                co=3, fused=(hw >= 8))
    return {"enc": enc, "dec": dec, "last": last}


# ---------------------------------------------------------------------------
# Full Generator forward (NCHW in / NCHW out, like the PyTorch module)
# ---------------------------------------------------------------------------
def _single_forward(params, x_hwc):
    h = x_hwc.astype(jnp.bfloat16)
    skips = []
    for layer in params["enc"]:              # e1..e8: Conv + [BN] + LeakyReLU(0.2)
        fn = conv2d_fused if layer["fused"] else conv2d_generic
        h = fn(h, layer["B"], layer["s"], layer["c"], "leaky", layer["co"])
        skips.append(h)

    dec = params["dec"]
    l0 = dec[0]                              # d1: ConvT(e8) + BN + ReLU (no concat in)
    h = convT_generic(h, l0["B"], l0["s"], l0["c"], "relu", l0["co"])
    for k in range(1, 7):                    # d2..d7: ConvT(cat(prev, skip)) + BN + ReLU
        layer = dec[k]
        skip = skips[7 - k]                  # d2->e7 ... d7->e2
        if layer["fused"]:
            h = convT_cat_fused(h, skip, layer["B"], layer["s"], layer["c"],
                                "relu", layer["co"])
        else:
            h = convT_generic(jnp.concatenate([h, skip], axis=-1),
                              layer["B"], layer["s"], layer["c"], "relu",
                              layer["co"])
    last = params["last"]                    # last: ConvT(cat(d7, e1)) + bias + tanh
    h = convT_cat_fused(h, skips[0], last["B"], last["s"], last["c"],
                        "tanh", last["co"], out_dtype=jnp.float32)
    return h


def generator_forward(params, x_nchw):
    x_nhwc = jnp.transpose(x_nchw, (0, 2, 3, 1))
    outs = [_single_forward(params, x_nhwc[n]) for n in range(x_nhwc.shape[0])]
    y = jnp.stack(outs, axis=0)
    return jnp.transpose(y, (0, 3, 1, 2)).astype(jnp.float32)


# ---------------------------------------------------------------------------
# Tiny independent numpy references (self-check of every conv lowering path)
# ---------------------------------------------------------------------------
def _conv2d_ref(x, w):  # x (H,W,C), w (Co,Ci,4,4), stride 2, pad 1
    H, W, C = x.shape
    Co = w.shape[0]
    OH, OW = H // 2, W // 2
    xp = np.pad(x, ((1, 1), (1, 1), (0, 0)))
    out = np.zeros((OH, OW, Co), np.float32)
    for oh in range(OH):
        for ow in range(OW):
            patch = xp[2 * oh:2 * oh + 4, 2 * ow:2 * ow + 4, :]
            out[oh, ow] = np.einsum("ijc,ocij->o", patch, w)
    return out


def _convT_ref(x, w):  # x (H,W,C), w (Ci,Co,4,4), stride 2, pad 1
    H, W, C = x.shape
    Co = w.shape[1]
    out = np.zeros((2 * H, 2 * W, Co), np.float32)
    for ih in range(H):
        for iw in range(W):
            for kh in range(4):
                for kw in range(4):
                    oh, ow = 2 * ih - 1 + kh, 2 * iw - 1 + kw
                    if 0 <= oh < 2 * H and 0 <= ow < 2 * W:
                        out[oh, ow] += x[ih, iw] @ w[:, :, kh, kw]
    return out


if __name__ == "__main__":
    key = jax.random.PRNGKey(0)
    kp, kx, k1, k2, k3, k4, k5, k6, k7, k8 = jax.random.split(key, 10)

    def _rb(a):  # pre-round to bf16 so the numpy reference sees MXU inputs
        return np.asarray(jnp.asarray(a, jnp.bfloat16).astype(jnp.float32))

    ones = lambda n: _row(jnp.ones((n,), jnp.float32), 128)
    zeros = lambda n: _row(jnp.zeros((n,), jnp.float32), 128)

    # fused conv (implicit im2col via space-to-depth taps)
    x = _rb(jax.random.normal(k1, (16, 16, 8)))
    w = _rb(0.2 * jax.random.normal(k2, (8, 8, 4, 4)))
    got = conv2d_fused(jnp.asarray(x, jnp.bfloat16),
                       _pad_cols(conv_w_to_mm_s2d(w), 128),
                       ones(8), zeros(8), "none", 8, out_dtype=jnp.float32)
    np.testing.assert_allclose(np.asarray(got), _conv2d_ref(x, w),
                               rtol=2e-3, atol=2e-3)

    # generic conv (XLA im2col path)
    x = _rb(jax.random.normal(k3, (4, 4, 8)))
    w = _rb(0.2 * jax.random.normal(k4, (8, 8, 4, 4)))
    got = conv2d_generic(jnp.asarray(x, jnp.bfloat16),
                         _pad_cols(conv_w_to_mm(jnp.asarray(w)), 128),
                         ones(8), zeros(8), "none", 8, out_dtype=jnp.float32)
    np.testing.assert_allclose(np.asarray(got), _conv2d_ref(x, w),
                               rtol=2e-3, atol=2e-3)

    # fused conv-transpose with fused skip concat
    x1 = _rb(jax.random.normal(k5, (8, 8, 8)))
    x2 = _rb(jax.random.normal(k6, (8, 8, 8)))
    w = _rb(0.2 * jax.random.normal(k7, (16, 8, 4, 4)))
    got = convT_cat_fused(jnp.asarray(x1, jnp.bfloat16),
                          jnp.asarray(x2, jnp.bfloat16),
                          _pad_cols(convT_w_to_mm(w), 128),
                          ones(32), zeros(32), "none", 8, out_dtype=jnp.float32)
    ref = _convT_ref(np.concatenate([x1, x2], axis=-1), w)
    np.testing.assert_allclose(np.asarray(got), ref, rtol=2e-3, atol=2e-3)

    # generic conv-transpose
    x = _rb(jax.random.normal(k8, (2, 2, 16)))
    got = convT_generic(jnp.asarray(x, jnp.bfloat16),
                        _pad_cols(convT_w_to_mm(w), 128),
                        ones(32), zeros(32), "none", 8, out_dtype=jnp.float32)
    np.testing.assert_allclose(np.asarray(got), _convT_ref(x, w),
                               rtol=2e-3, atol=2e-3)

    # --- full Generator forward ---
    # 8 stride-2 downsamples require spatial size 256 (architectural minimum
    # for this module); batch is kept at 1 to stay small.
    params = init_params(kp, in_hw=256)
    x = jax.random.normal(kx, (1, 3, 256, 256), jnp.float32)
    fwd = jax.jit(functools.partial(generator_forward, params))
    out = jax.block_until_ready(fwd(x))
    assert out.shape == (1, 3, 256, 256), out.shape
    assert bool(jnp.all(jnp.isfinite(out)))
    print("KERNEL_OK")
</pallas_src>

<mosaic_0001>
module attributes {stable_mosaic.version = 11 : i64} {
  func.func @_conv_s2d_kernel(%arg0: i32, %arg1: i32, %arg2: memref<9x9x32xbf16, #tpu.memory_space<vmem>>, %arg3: memref<128x128xbf16, #tpu.memory_space<vmem>>, %arg4: memref<1x128xf32, #tpu.memory_space<vmem>>, %arg5: memref<1x128xf32, #tpu.memory_space<vmem>>, %arg6: memref<64x128xf32, #tpu.memory_space<vmem>>) attributes {dimension_semantics = [#tpu.dimension_semantics<parallel>, #tpu.dimension_semantics<parallel>], iteration_bounds = array<i64: 1, 1>, scalar_prefetch = 0 : i64, scratch_operands = 0 : i64, tpu.core_type = #tpu.core_type<tc>, window_params = [{pipeline_mode = #tpu.pipeline_mode<synchronous>, transform_indices = @transform_0, window_bounds = array<i64: 9, 9, 32>}, {transform_indices = @transform_1, window_bounds = array<i64: 128, 128>}, {transform_indices = @transform_2, window_bounds = array<i64: 1, 128>}, {transform_indices = @transform_3, window_bounds = array<i64: 1, 128>}, {transform_indices = @transform_4, window_bounds = array<i64: 64, 128>}]} {
    %c8_i32 = arith.constant 8 : i32
    %0 = arith.muli %arg1, %c8_i32 : i32
    %c0_i32 = arith.constant 0 : i32
    %1 = arith.addi %0, %c0_i32 : i32
    %2 = arith.index_cast %1 : i32 to index
    %c0 = arith.constant 0 : index
    %c0_0 = arith.constant 0 : index
    %3 = vector.load %arg2[%2, %c0, %c0_0] : memref<9x9x32xbf16, #tpu.memory_space<vmem>>, vector<8x9x32xbf16>
    %4 = vector.extract_strided_slice %3 {offsets = [0, 0, 0], sizes = [8, 8, 32], strides = [1, 1, 1]} : vector<8x9x32xbf16> to vector<8x8x32xbf16>
    %5 = vector.shape_cast %4 : vector<8x8x32xbf16> to vector<64x32xbf16>
    %c0_1 = arith.constant 0 : index
    %c0_2 = arith.constant 0 : index
    %6 = vector.load %arg3[%c0_1, %c0_2] : memref<128x128xbf16, #tpu.memory_space<vmem>>, vector<32x128xbf16>
    %cst = arith.constant dense<0.000000e+00> : vector<64x128xf32>
    %7 = tpu.matmul %5, %6, %cst {dimension_numbers = #tpu.dot_dimension_numbers<[1], [0], [0], [1], [0, 0, 1, 1], [], []>} : vector<64x32xbf16>, vector<32x128xbf16>, vector<64x128xf32> -> vector<64x128xf32>
    %8 = vector.extract_strided_slice %3 {offsets = [0, 1, 0], sizes = [8, 8, 32], strides = [1, 1, 1]} : vector<8x9x32xbf16> to vector<8x8x32xbf16>
    %9 = vector.shape_cast %8 : vector<8x8x32xbf16> to vector<64x32xbf16>
    %c32 = arith.constant 32 : index
    %c0_3 = arith.constant 0 : index
    %10 = vector.load %arg3[%c32, %c0_3] : memref<128x128xbf16, #tpu.memory_space<vmem>>, vector<32x128xbf16>
    %cst_4 = arith.constant dense<0.000000e+00> : vector<64x128xf32>
    %11 = tpu.matmul %9, %10, %cst_4 {dimension_numbers = #tpu.dot_dimension_numbers<[1], [0], [0], [1], [0, 0, 1, 1], [], []>} : vector<64x32xbf16>, vector<32x128xbf16>, vector<64x128xf32> -> vector<64x128xf32>
    %12 = arith.addf %7, %11 : vector<64x128xf32>
    %c1_i32 = arith.constant 1 : i32
    %13 = arith.addi %0, %c1_i32 : i32
    %14 = arith.index_cast %13 : i32 to index
    %c0_5 = arith.constant 0 : index
    %c0_6 = arith.constant 0 : index
    %15 = vector.load %arg2[%14, %c0_5, %c0_6] : memref<9x9x32xbf16, #tpu.memory_space<vmem>>, vector<8x9x32xbf16>
    %16 = vector.extract_strided_slice %15 {offsets = [0, 0, 0], sizes = [8, 8, 32], strides = [1, 1, 1]} : vector<8x9x32xbf16> to vector<8x8x32xbf16>
    %17 = vector.shape_cast %16 : vector<8x8x32xbf16> to vector<64x32xbf16>
    %c64 = arith.constant 64 : index
    %c0_7 = arith.constant 0 : index
    %18 = vector.load %arg3[%c64, %c0_7] : memref<128x128xbf16, #tpu.memory_space<vmem>>, vector<32x128xbf16>
    %cst_8 = arith.constant dense<0.000000e+00> : vector<64x128xf32>
    %19 = tpu.matmul %17, %18, %cst_8 {dimension_numbers = #tpu.dot_dimension_numbers<[1], [0], [0], [1], [0, 0, 1, 1], [], []>} : vector<64x32xbf16>, vector<32x128xbf16>, vector<64x128xf32> -> vector<64x128xf32>
    %20 = arith.addf %12, %19 : vector<64x128xf32>
    %21 = vector.extract_strided_slice %15 {offsets = [0, 1, 0], sizes = [8, 8, 32], strides = [1, 1, 1]} : vector<8x9x32xbf16> to vector<8x8x32xbf16>
    %22 = vector.shape_cast %21 : vector<8x8x32xbf16> to vector<64x32xbf16>
    %c96 = arith.constant 96 : index
    %c0_9 = arith.constant 0 : index
    %23 = vector.load %arg3[%c96, %c0_9] : memref<128x128xbf16, #tpu.memory_space<vmem>>, vector<32x128xbf16>
    %cst_10 = arith.constant dense<0.000000e+00> : vector<64x128xf32>
    %24 = tpu.matmul %22, %23, %cst_10 {dimension_numbers = #tpu.dot_dimension_numbers<[1], [0], [0], [1], [0, 0, 1, 1], [], []>} : vector<64x32xbf16>, vector<32x128xbf16>, vector<64x128xf32> -> vector<64x128xf32>
    %25 = arith.addf %20, %24 : vector<64x128xf32>
    %c0_11 = arith.constant 0 : index
    %c0_12 = arith.constant 0 : index
    %26 = vector.load %arg4[%c0_11, %c0_12] : memref<1x128xf32, #tpu.memory_space<vmem>>, vector<1x128xf32>
    %27 = vector.broadcast %26 : vector<1x128xf32> to vector<64x128xf32>
    %28 = arith.mulf %25, %27 : vector<64x128xf32>
    %c0_13 = arith.constant 0 : index
    %c0_14 = arith.constant 0 : index
    %29 = vector.load %arg5[%c0_13, %c0_14] : memref<1x128xf32, #tpu.memory_space<vmem>>, vector<1x128xf32>
    %30 = vector.broadcast %29 : vector<1x128xf32> to vector<64x128xf32>
    %31 = arith.addf %28, %30 : vector<64x128xf32>
    %c0_15 = arith.constant 0 : index
    %c0_16 = arith.constant 0 : index
    %32 = vector.load %arg6[%c0_15, %c0_16] : memref<64x128xf32, #tpu.memory_space<vmem>>, vector<64x128xf32>
    tpu.vector_store %arg6[%c0_15, %c0_16], %31 {strides = array<i32>} : memref<64x128xf32, #tpu.memory_space<vmem>>, vector<64x128xf32>,
    return
  }
  func.func @transform_0(%arg0: i32, %arg1: i32) -> (i32, i32, i32) {
    %c0_i32 = arith.constant 0 : i32
    %c0_i32_0 = arith.constant 0 : i32
    %c0_i32_1 = arith.constant 0 : i32
    %c0_i32_2 = arith.constant 0 : i32
    return %c0_i32, %c0_i32_0, %c0_i32_1 : i32, i32, i32
  }
  func.func @transform_1(%arg0: i32, %arg1: i32) -> (i32, i32) {
    %c0_i32 = arith.constant 0 : i32
    %c0_i32_0 = arith.constant 0 : i32
    return %c0_i32, %arg0 : i32, i32
  }
  func.func @transform_2(%arg0: i32, %arg1: i32) -> (i32, i32) {
    %c0_i32 = arith.constant 0 : i32
    %c0_i32_0 = arith.constant 0 : i32
    return %c0_i32, %arg0 : i32, i32
  }
  func.func @transform_3(%arg0: i32, %arg1: i32) -> (i32, i32) {
    %c0_i32 = arith.constant 0 : i32
    %c0_i32_0 = arith.constant 0 : i32
    return %c0_i32, %arg0 : i32, i32
  }
  func.func @transform_4(%arg0: i32, %arg1: i32) -> (i32, i32) {
    %c0_i32 = arith.constant 0 : i32
    return %arg1, %arg0 : i32, i32
  }
}

</mosaic_0001>

<llo_original>
// kernel: tpu_custom_call.1
$region0: #{tpu_custom_call.1}
  #allocation0 [shape = 'u32[]', space=smem, size = 0x4, offset = 0x4, fixed_abs, tag = 'smem constant byte address 0x4 - core index']
  #allocation1 [shape = 'u32[144,128]{1,0:T(1,128)}', space=vmem, size = 0x12000, scoped, tag = 'internal scratch']
  %s0 = inlined_call_operand.hbm [shape: bf16[9,9,32], index: 0, kind: input, shape index: {}]
  %s1 = inlined_call_operand.hbm [shape: bf16[128,128], index: 1, kind: input, shape index: {}]
  %s2 = inlined_call_operand.vmem [shape: f32[1,128], index: 2, kind: input, shape index: {}]
  %s3 = inlined_call_operand.vmem [shape: f32[1,128], index: 3, kind: input, shape index: {}]
  %s4 = inlined_call_operand.hbm [shape: f32[64,128], index: 4, kind: output, shape index: {}]
  %s5 = sld [smem:[#allocation0]]
  $region34: #{tpu_custom_call.1} parent=0
    _
  %s7 = ssub.s32 1, %s5
  %s8 = scalar_select 0, %s7, %s5
  $region1: #{tpu_custom_call.1} parent=0
    #allocation2 [shape = 'u8[36864]{0}', space=vmem, size = 0x9000, scoped, tag = 'input window, operand 0, single buffered']
    #allocation3 [shape = 's32[1]{0}', space=sflag, size = 0x4, scoped, tag = 'scoped memory for tpu_custom_call.1']
    #allocation4 [shape = 's32[1]{0}', space=sflag, size = 0x4, scoped, tag = 'scoped memory for tpu_custom_call.1']
    #allocation5 [shape = 'u8[32768]{0}', space=vmem, size = 0x8000, scoped, tag = 'input window, operand 1, single buffered']
    #allocation6 [shape = 's32[1]{0}', space=sflag, size = 0x4, scoped, tag = 'scoped memory for tpu_custom_call.1']
    #allocation7 [shape = 'u8[32768]{0}', space=vmem, size = 0x8000, scoped, tag = 'output window, operand 0, single buffered']
    %9 = vsyncpa [#allocation3], 0
    %10 = vsyncpa [#allocation6], 0
    %11 = vsyncpa [#allocation4], 0
    // Predicated region
    $region2: #{tpu_custom_call.1} parent=1 // pred_check
      _
    $region3: #{tpu_custom_call.1} parent=1 // pred_check_branch
      %13 = sbr.rel (0) target = $region5
    $region4: #{tpu_custom_call.1} parent=1 // pred_region
      %s15 = ssub.s32 1152, 1152
      %16 = vsyncadd [#allocation3], %s15
      %s17 = sshll.u32 [#allocation2], 4
      %s18 = int_to_ptr.vmem [resolvable:$true] %s17
      %23 = dma.hbm_to_vmem [thread:$0]  %s0, 1152, %s18, [#allocation3], 64, 64, 4
    $region5: #{tpu_custom_call.1} parent=1 // pred_fallthru
      _
    // Predicated region
    $region6: #{tpu_custom_call.1} parent=1 // pred_check
      _
    $region7: #{tpu_custom_call.1} parent=1 // pred_check_branch
      %25 = sbr.rel (0) target = $region9
    $region8: #{tpu_custom_call.1} parent=1 // pred_region
      %s27 = ssub.s32 1024, 1024
      %28 = vsyncadd [#allocation6], %s27
      %s29 = sshll.u32 [#allocation5], 4
      %s30 = int_to_ptr.vmem [resolvable:$true] %s29
      %35 = dma.hbm_to_vmem [thread:$0]  %s1, 1024, %s30, [#allocation6], 64, 64, 4
    $region9: #{tpu_custom_call.1} parent=1 // pred_fallthru
      _
    // Predicated region
    $region10: #{tpu_custom_call.1} parent=1 // pred_check
      _
    $region11: #{tpu_custom_call.1} parent=1 // pred_check_branch
      %37 = sbr.rel (0) target = $region13
    $region12: #{tpu_custom_call.1} parent=1 // pred_region
      _
    $region13: #{tpu_custom_call.1} parent=1 // pred_fallthru
      _
    // Predicated region
    $region14: #{tpu_custom_call.1} parent=1 // pred_check
      _
    $region15: #{tpu_custom_call.1} parent=1 // pred_check_branch
      %39 = sbr.rel (0) target = $region17
    $region16: #{tpu_custom_call.1} parent=1 // pred_region
      _
    $region17: #{tpu_custom_call.1} parent=1 // pred_fallthru
      _
    // Predicated region
    $region18: #{tpu_custom_call.1} parent=1 // pred_check
      _
    $region19: #{tpu_custom_call.1} parent=1 // pred_check_branch
      %41 = sbr.rel (0) target = $region21
    $region20: #{tpu_custom_call.1} parent=1 // pred_region
      %42 = dma.done [#allocation3], 1152
    $region21: #{tpu_custom_call.1} parent=1 // pred_fallthru
      _
    // Predicated region
    $region22: #{tpu_custom_call.1} parent=1 // pred_check
      _
    $region23: #{tpu_custom_call.1} parent=1 // pred_check_branch
      %44 = sbr.rel (0) target = $region25
    $region24: #{tpu_custom_call.1} parent=1 // pred_region
      %45 = dma.done [#allocation6], 1024
    $region25: #{tpu_custom_call.1} parent=1 // pred_fallthru
      _
    %s47 = smul.u32 0, 8
    %s48 = smul.u32 %s47, 2
    %s49 = smul.addr %s48, 4
    %s50 = scalar_lea.vmem [#allocation2], %s49
    %v51 = vld [vmem:[%s50] sm:$0xf]
    %v52 = vld [vmem:[%s50 + $0x4] sm:$0x1]
    %v53 = vld [vmem:[%s50 + $0x8] sm:$0xf]
    %v54 = vld [vmem:[%s50 + $0xc] sm:$0x1]
    %v55 = vld [vmem:[%s50 + $0x10] sm:$0xf]
    %v56 = vld [vmem:[%s50 + $0x14] sm:$0x1]
    %v57 = vld [vmem:[%s50 + $0x18] sm:$0xf]
    %v58 = vld [vmem:[%s50 + $0x1c] sm:$0x1]
    %v59 = vld [vmem:[%s50 + $0x20] sm:$0xf]
    %v60 = vld [vmem:[%s50 + $0x24] sm:$0x1]
    %v61 = vld [vmem:[%s50 + $0x28] sm:$0xf]
    %v62 = vld [vmem:[%s50 + $0x2c] sm:$0x1]
    %v63 = vld [vmem:[%s50 + $0x30] sm:$0xf]
    %v64 = vld [vmem:[%s50 + $0x34] sm:$0x1]
    %v65 = vld [vmem:[%s50 + $0x38] sm:$0xf]
    %v66 = vld [vmem:[%s50 + $0x3c] sm:$0x1]
    %v67 = vld [vmem:[#allocation5] sm:$0xf]
    %v68 = vld [vmem:[#allocation5 + $0x4] sm:$0xf]
    %v69 = vld [vmem:[#allocation5 + $0x8] sm:$0xf]
    %v70 = vld [vmem:[#allocation5 + $0xc] sm:$0xf]
    %vm71 = vsmask.f32 3328
    %vm72 = vsmask.f32 7440
    %vm73 = vmor %vm71, %vm72
    %v75 = vshrl.u32 %v51, 16
    %v77 = vrot.slane %v75, 4
    %v78 = vshll.u32 %v51, 16
    %v80 = vrot.slane %v78, 5
    %v81 = vor.u32 %v77, %v80
    %v82 = vrot.slane %v81, 4
    %v84 = vshll.u32 %v52, 16
    %v86 = vrot.slane %v84, 5
    %v87 = vsel %vm73, %v82, %v86
    %v89 = vshrl.u32 %v53, 16
    %v91 = vrot.slane %v89, 4
    %v92 = vshll.u32 %v53, 16
    %v94 = vrot.slane %v92, 5
    %v95 = vor.u32 %v91, %v94
    %v96 = vrot.slane %v95, 4
    %v98 = vshll.u32 %v54, 16
    %v100 = vrot.slane %v98, 5
    %v101 = vsel %vm73, %v96, %v100
    %v103 = vshrl.u32 %v55, 16
    %v105 = vrot.slane %v103, 4
    %v106 = vshll.u32 %v55, 16
    %v108 = vrot.slane %v106, 5
    %v109 = vor.u32 %v105, %v108
    %v110 = vrot.slane %v109, 4
    %v112 = vshll.u32 %v56, 16
    %v114 = vrot.slane %v112, 5
    %v115 = vsel %vm73, %v110, %v114
    %v117 = vshrl.u32 %v57, 16
    %v119 = vrot.slane %v117, 4
    %v120 = vshll.u32 %v57, 16
    %v122 = vrot.slane %v120, 5
    %v123 = vor.u32 %v119, %v122
    %v124 = vrot.slane %v123, 4
    %v126 = vshll.u32 %v58, 16
    %v128 = vrot.slane %v126, 5
    %v129 = vsel %vm73, %v124, %v128
    %v131 = vshrl.u32 %v59, 16
    %v133 = vrot.slane %v131, 4
    %v134 = vshll.u32 %v59, 16
    %v136 = vrot.slane %v134, 5
    %v137 = vor.u32 %v133, %v136
    %v138 = vrot.slane %v137, 4
    %v140 = vshll.u32 %v60, 16
    %v142 = vrot.slane %v140, 5
    %v143 = vsel %vm73, %v138, %v142
    %v145 = vshrl.u32 %v61, 16
    %v147 = vrot.slane %v145, 4
    %v148 = vshll.u32 %v61, 16
    %v150 = vrot.slane %v148, 5
    %v151 = vor.u32 %v147, %v150
    %v152 = vrot.slane %v151, 4
    %v154 = vshll.u32 %v62, 16
    %v156 = vrot.slane %v154, 5
    %v157 = vsel %vm73, %v152, %v156
    %v159 = vshrl.u32 %v63, 16
    %v161 = vrot.slane %v159, 4
    %v162 = vshll.u32 %v63, 16
    %v164 = vrot.slane %v162, 5
    %v165 = vor.u32 %v161, %v164
    %v166 = vrot.slane %v165, 4
    %v168 = vshll.u32 %v64, 16
    %v170 = vrot.slane %v168, 5
    %v171 = vsel %vm73, %v166, %v170
    %v173 = vshrl.u32 %v65, 16
    %v175 = vrot.slane %v173, 4
    %v176 = vshll.u32 %v65, 16
    %v178 = vrot.slane %v176, 5
    %v179 = vor.u32 %v175, %v178
    %v180 = vrot.slane %v179, 4
    %v182 = vshll.u32 %v66, 16
    %v184 = vrot.slane %v182, 5
    %v185 = vsel %vm73, %v180, %v184
    %v186 = vld [vmem:[#allocation5 + $0x10] sm:$0xf]
    %v187 = vld [vmem:[#allocation5 + $0x14] sm:$0xf]
    %v188 = vld [vmem:[#allocation5 + $0x18] sm:$0xf]
    %v189 = vld [vmem:[#allocation5 + $0x1c] sm:$0xf]
    %v190 = vunpack.c.l.b16 %v87
    %v191 = vunpack.c.l.b16 %v101
    %v192 = vunpack.c.l.b16 %v115
    %v193 = vunpack.c.l.b16 %v129
    %v194 = vunpack.c.l.b16 %v143
    %v195 = vunpack.c.l.b16 %v157
    %v196 = vunpack.c.l.b16 %v171
    %v197 = vunpack.c.l.b16 %v185
    %v198 = vpack.c.b16 %v191, %v190
    %v199 = vpack.c.b16 %v193, %v192
    %v200 = vpack.c.b16 %v195, %v194
    %v201 = vpack.c.b16 %v197, %v196
    %v206 = vunpack.c.l.b16 %v186
    %v207 = vunpack.c.l.b16 %v187
    %v208 = vunpack.c.l.b16 %v188
    %v209 = vunpack.c.l.b16 %v189
    %v210 = vpack.c.b16 %v207, %v206
    %v211 = vpack.c.b16 %v209, %v208
    %vm214 = vcmask 261120
    %v216 = vsel %vm214, %v198, 0
    %v219 = vsel %vm214, %v199, 0
    %v222 = vsel %vm214, %v200, 0
    %v225 = vsel %vm214, %v201, 0
    %227 = vmatprep.subr.bf16.mxu0 0
    %228 = vmatpush1.bf16.msra.mxu0 %v210
    %229 = vmatprep.subr.bf16.mxu0 0
    %230 = vmatpush1.bf16.msra.mxu0 %v211
    %231 = vmatprep.subr.bf16.mxu0 0
    %232 = vmatpush1.bf16.msra.mxu0 0
    %233 = vmatprep.subr.bf16.mxu0 0
    %234 = vmatpush1.bf16.msra.mxu0 0
    %235 = vmatprep.subr.bf16.mxu0 0
    %236 = vmatpush1.bf16.msra.mxu0 0
    %237 = vmatprep.subr.bf16.mxu0 0
    %238 = vmatpush1.bf16.msra.mxu0 0
    %239 = vmatprep.subr.bf16.mxu0 0
    %240 = vmatpush1.bf16.msra.mxu0 0
    %241 = vmatprep.subr.bf16.mxu0 0
    %242 = vmatpush1.bf16.msra.mxu0 0
    %243 = vmatprep.subr.bf16.mxu0 0
    %244 = vmatpush1.bf16.msra.mxu0 0
    %245 = vmatprep.subr.bf16.mxu0 0
    %246 = vmatpush1.bf16.msra.mxu0 0
    %247 = vmatprep.subr.bf16.mxu0 0
    %248 = vmatpush1.bf16.msra.mxu0 0
    %249 = vmatprep.subr.bf16.mxu0 0
    %250 = vmatpush1.bf16.msra.mxu0 0
    %251 = vmatprep.subr.bf16.mxu0 0
    %252 = vmatpush1.bf16.msra.mxu0 0
    %253 = vmatprep.subr.bf16.mxu0 0
    %254 = vmatpush1.bf16.msra.mxu0 0
    %255 = vmatprep.subr.bf16.mxu0 0
    %256 = vmatpush1.bf16.msra.mxu0 0
    %257 = vmatprep.subr.bf16.mxu0 0
    %258 = vmatpush1.bf16.msra.mxu0 0
    %259 = vmatprep.mubr.bf16.mxu0 0
    %260 = vmatmul.mubr.bf16.gmra.mrb[0].mxu0 %v216
    %v261 = vpop.f32.mrb[0].mxu0
    %v262 = vadd.f32 0.0, %v261
    %v263 = vpop.f32.mrb[0].mxu0
    %v264 = vpop.f32.mrb[0].mxu0
    %v265 = vadd.f32 0.0, %v264
    %v266 = vpop.f32.mrb[0].mxu0
    %267 = vmatprep.mubr.bf16.mxu0 0
    %268 = vmatmul.mubr.bf16.gmra.mrb[0].mxu0 %v219
    %v269 = vpop.f32.mrb[0].mxu0
    %v270 = vadd.f32 0.0, %v269
    %v271 = vpop.f32.mrb[0].mxu0
    %v272 = vpop.f32.mrb[0].mxu0
    %v273 = vadd.f32 0.0, %v272
    %v274 = vpop.f32.mrb[0].mxu0
    %275 = vmatprep.mubr.bf16.mxu0 0
    %276 = vmatmul.mubr.bf16.gmra.mrb[0].mxu0 %v222
    %v277 = vpop.f32.mrb[0].mxu0
    %v278 = vadd.f32 0.0, %v277
    %v279 = vpop.f32.mrb[0].mxu0
    %v280 = vpop.f32.mrb[0].mxu0
    %v281 = vadd.f32 0.0, %v280
    %v282 = vpop.f32.mrb[0].mxu0
    %283 = vmatprep.mubr.bf16.mxu0 0
    %284 = vmatmul.mubr.bf16.gmra.mrb[0].mxu0 %v225
    %v285 = vpop.f32.mrb[0].mxu0
    %v286 = vadd.f32 0.0, %v285
    %v287 = vpop.f32.mrb[0].mxu0
    %v288 = vpop.f32.mrb[0].mxu0
    %v289 = vadd.f32 0.0, %v288
    %v290 = vpop.f32.mrb[0].mxu0
    %291 = vdwg.mxu0
    %v300 = vunpack.c.l.b16 %v51
    %v301 = vunpack.c.l.b16 %v53
    %v302 = vunpack.c.l.b16 %v55
    %v303 = vunpack.c.l.b16 %v57
    %v304 = vunpack.c.l.b16 %v59
    %v305 = vunpack.c.l.b16 %v61
    %v306 = vunpack.c.l.b16 %v63
    %v307 = vunpack.c.l.b16 %v65
    %v308 = vpack.c.b16 %v301, %v300
    %v309 = vpack.c.b16 %v303, %v302
    %v310 = vpack.c.b16 %v305, %v304
    %v311 = vpack.c.b16 %v307, %v306
    %v316 = vunpack.c.l.b16 %v67
    %v317 = vunpack.c.l.b16 %v68
    %v318 = vunpack.c.l.b16 %v69
    %v319 = vunpack.c.l.b16 %v70
    %v320 = vpack.c.b16 %v317, %v316
    %v321 = vpack.c.b16 %v319, %v318
    %v325 = vsel %vm214, %v308, 0
    %v328 = vsel %vm214, %v309, 0
    %v331 = vsel %vm214, %v310, 0
    %v334 = vsel %vm214, %v311, 0
    %336 = vmatprep.subr.bf16.mxu0 0
    %337 = vmatpush1.bf16.msra.mxu0 %v320
    %338 = vmatprep.subr.bf16.mxu0 0
    %339 = vmatpush1.bf16.msra.mxu0 %v321
    %340 = vmatprep.subr.bf16.mxu0 0
    %341 = vmatpush1.bf16.msra.mxu0 0
    %342 = vmatprep.subr.bf16.mxu0 0
    %343 = vmatpush1.bf16.msra.mxu0 0
    %344 = vmatprep.subr.bf16.mxu0 0
    %345 = vmatpush1.bf16.msra.mxu0 0
    %346 = vmatprep.subr.bf16.mxu0 0
    %347 = vmatpush1.bf16.msra.mxu0 0
    %348 = vmatprep.subr.bf16.mxu0 0
    %349 = vmatpush1.bf16.msra.mxu0 0
    %350 = vmatprep.subr.bf16.mxu0 0
    %351 = vmatpush1.bf16.msra.mxu0 0
    %352 = vmatprep.subr.bf16.mxu0 0
    %353 = vmatpush1.bf16.msra.mxu0 0
    %354 = vmatprep.subr.bf16.mxu0 0
    %355 = vmatpush1.bf16.msra.mxu0 0
    %356 = vmatprep.subr.bf16.mxu0 0
    %357 = vmatpush1.bf16.msra.mxu0 0
    %358 = vmatprep.subr.bf16.mxu0 0
    %359 = vmatpush1.bf16.msra.mxu0 0
    %360 = vmatprep.subr.bf16.mxu0 0
    %361 = vmatpush1.bf16.msra.mxu0 0
    %362 = vmatprep.subr.bf16.mxu0 0
    %363 = vmatpush1.bf16.msra.mxu0 0
    %364 = vmatprep.subr.bf16.mxu0 0
    %365 = vmatpush1.bf16.msra.mxu0 0
    %366 = vmatprep.subr.bf16.mxu0 0
    %367 = vmatpush1.bf16.msra.mxu0 0
    %368 = vmatprep.mubr.bf16.mxu0 0
    %369 = vmatmul.mubr.bf16.gmra.mrb[0].mxu0 %v325
    %v370 = vpop.f32.mrb[0].mxu0
    %v371 = vadd.f32 %v262, %v370
    %v372 = vpop.f32.mrb[0].mxu0
    %v373 = vpop.f32.mrb[0].mxu0
    %v374 = vadd.f32 %v265, %v373
    %v375 = vpop.f32.mrb[0].mxu0
    %376 = vmatprep.mubr.bf16.mxu0 0
    %377 = vmatmul.mubr.bf16.gmra.mrb[0].mxu0 %v328
    %v378 = vpop.f32.mrb[0].mxu0
    %v379 = vadd.f32 %v270, %v378
    %v380 = vpop.f32.mrb[0].mxu0
    %v381 = vpop.f32.mrb[0].mxu0
    %v382 = vadd.f32 %v273, %v381
    %v383 = vpop.f32.mrb[0].mxu0
    %384 = vmatprep.mubr.bf16.mxu0 0
    %385 = vmatmul.mubr.bf16.gmra.mrb[0].mxu0 %v331
    %v386 = vpop.f32.mrb[0].mxu0
    %v387 = vadd.f32 %v278, %v386
    %v388 = vpop.f32.mrb[0].mxu0
    %v389 = vpop.f32.mrb[0].mxu0
    %v390 = vadd.f32 %v281, %v389
    %v391 = vpop.f32.mrb[0].mxu0
    %392 = vmatprep.mubr.bf16.mxu0 0
    %393 = vmatmul.mubr.bf16.gmra.mrb[0].mxu0 %v334
    %v394 = vpop.f32.mrb[0].mxu0
    %v395 = vadd.f32 %v286, %v394
    %v396 = vpop.f32.mrb[0].mxu0
    %v397 = vpop.f32.mrb[0].mxu0
    %v398 = vadd.f32 %v289, %v397
    %v399 = vpop.f32.mrb[0].mxu0
    %400 = vdwg.mxu0
    %s401 = sadd.s32 %s47, 1
    %s402 = smul.u32 %s401, 2
    %s403 = smul.addr %s402, 4
    %s404 = scalar_lea.vmem [#allocation2], %s403
    %v405 = vld [vmem:[%s404] sm:$0xf]
    %v406 = vld [vmem:[%s404 + $0x4] sm:$0x1]
    %v407 = vld [vmem:[%s404 + $0x8] sm:$0xf]
    %v408 = vld [vmem:[%s404 + $0xc] sm:$0x1]
    %v409 = vld [vmem:[%s404 + $0x10] sm:$0xf]
    %v410 = vld [vmem:[%s404 + $0x14] sm:$0x1]
    %v411 = vld [vmem:[%s404 + $0x18] sm:$0xf]
    %v412 = vld [vmem:[%s404 + $0x1c] sm:$0x1]
    %v413 = vld [vmem:[%s404 + $0x20] sm:$0xf]
    %v414 = vld [vmem:[%s404 + $0x24] sm:$0x1]
    %v415 = vld [vmem:[%s404 + $0x28] sm:$0xf]
    %v416 = vld [vmem:[%s404 + $0x2c] sm:$0x1]
    %v417 = vld [vmem:[%s404 + $0x30] sm:$0xf]
    %v418 = vld [vmem:[%s404 + $0x34] sm:$0x1]
    %v419 = vld [vmem:[%s404 + $0x38] sm:$0xf]
    %v420 = vld [vmem:[%s404 + $0x3c] sm:$0x1]
    %v421 = vld [vmem:[#allocation5 + $0x20] sm:$0xf]
    %v422 = vld [vmem:[#allocation5 + $0x24] sm:$0xf]
    %v423 = vld [vmem:[#allocation5 + $0x28] sm:$0xf]
    %v424 = vld [vmem:[#allocation5 + $0x2c] sm:$0xf]
    %v433 = vunpack.c.l.b16 %v405
    %v434 = vunpack.c.l.b16 %v407
    %v435 = vunpack.c.l.b16 %v409
    %v436 = vunpack.c.l.b16 %v411
    %v437 = vunpack.c.l.b16 %v413
    %v438 = vunpack.c.l.b16 %v415
    %v439 = vunpack.c.l.b16 %v417
    %v440 = vunpack.c.l.b16 %v419
    %v441 = vpack.c.b16 %v434, %v433
    %v442 = vpack.c.b16 %v436, %v435
    %v443 = vpack.c.b16 %v438, %v437
    %v444 = vpack.c.b16 %v440, %v439
    %v449 = vunpack.c.l.b16 %v421
    %v450 = vunpack.c.l.b16 %v422
    %v451 = vunpack.c.l.b16 %v423
    %v452 = vunpack.c.l.b16 %v424
    %v453 = vpack.c.b16 %v450, %v449
    %v454 = vpack.c.b16 %v452, %v451
    %v458 = vsel %vm214, %v441, 0
    %v461 = vsel %vm214, %v442, 0
    %v464 = vsel %vm214, %v443, 0
    %v467 = vsel %vm214, %v444, 0
    %469 = vmatprep.subr.bf16.mxu0 0
    %470 = vmatpush1.bf16.msra.mxu0 %v453
    %471 = vmatprep.subr.bf16.mxu0 0
    %472 = vmatpush1.bf16.msra.mxu0 %v454
    %473 = vmatprep.subr.bf16.mxu0 0
    %474 = vmatpush1.bf16.msra.mxu0 0
    %475 = vmatprep.subr.bf16.mxu0 0
    %476 = vmatpush1.bf16.msra.mxu0 0
    %477 = vmatprep.subr.bf16.mxu0 0
    %478 = vmatpush1.bf16.msra.mxu0 0
    %479 = vmatprep.subr.bf16.mxu0 0
    %480 = vmatpush1.bf16.msra.mxu0 0
    %481 = vmatprep.subr.bf16.mxu0 0
    %482 = vmatpush1.bf16.msra.mxu0 0
    %483 = vmatprep.subr.bf16.mxu0 0
    %484 = vmatpush1.bf16.msra.mxu0 0
    %485 = vmatprep.subr.bf16.mxu0 0
    %486 = vmatpush1.bf16.msra.mxu0 0
    %487 = vmatprep.subr.bf16.mxu0 0
    %488 = vmatpush1.bf16.msra.mxu0 0
    %489 = vmatprep.subr.bf16.mxu0 0
    %490 = vmatpush1.bf16.msra.mxu0 0
    %491 = vmatprep.subr.bf16.mxu0 0
    %492 = vmatpush1.bf16.msra.mxu0 0
    %493 = vmatprep.subr.bf16.mxu0 0
    %494 = vmatpush1.bf16.msra.mxu0 0
    %495 = vmatprep.subr.bf16.mxu0 0
    %496 = vmatpush1.bf16.msra.mxu0 0
    %497 = vmatprep.subr.bf16.mxu0 0
    %498 = vmatpush1.bf16.msra.mxu0 0
    %499 = vmatprep.subr.bf16.mxu0 0
    %500 = vmatpush1.bf16.msra.mxu0 0
    %501 = vmatprep.mubr.bf16.mxu0 0
    %502 = vmatmul.mubr.bf16.gmra.mrb[0].mxu0 %v458
    %v503 = vpop.f32.mrb[0].mxu0
    %v504 = vadd.f32 0.0, %v503
    %v505 = vpop.f32.mrb[0].mxu0
    %v506 = vpop.f32.mrb[0].mxu0
    %v507 = vadd.f32 0.0, %v506
    %v508 = vpop.f32.mrb[0].mxu0
    %509 = vmatprep.mubr.bf16.mxu0 0
    %510 = vmatmul.mubr.bf16.gmra.mrb[0].mxu0 %v461
    %v511 = vpop.f32.mrb[0].mxu0
    %v512 = vadd.f32 0.0, %v511
    %v513 = vpop.f32.mrb[0].mxu0
    %v514 = vpop.f32.mrb[0].mxu0
    %v515 = vadd.f32 0.0, %v514
    %v516 = vpop.f32.mrb[0].mxu0
    %517 = vmatprep.mubr.bf16.mxu0 0
    %518 = vmatmul.mubr.bf16.gmra.mrb[0].mxu0 %v464
    %v519 = vpop.f32.mrb[0].mxu0
    %v520 = vadd.f32 0.0, %v519
    %v521 = vpop.f32.mrb[0].mxu0
    %v522 = vpop.f32.mrb[0].mxu0
    %v523 = vadd.f32 0.0, %v522
    %v524 = vpop.f32.mrb[0].mxu0
    %525 = vmatprep.mubr.bf16.mxu0 0
    %526 = vmatmul.mubr.bf16.gmra.mrb[0].mxu0 %v467
    %v527 = vpop.f32.mrb[0].mxu0
    %v528 = vadd.f32 0.0, %v527
    %v529 = vpop.f32.mrb[0].mxu0
    %v530 = vpop.f32.mrb[0].mxu0
    %v531 = vadd.f32 0.0, %v530
    %v532 = vpop.f32.mrb[0].mxu0
    %533 = vdwg.mxu0
    %v534 = vadd.f32 %v371, %v504
    %v535 = vadd.f32 %v374, %v507
    %v536 = vadd.f32 %v379, %v512
    %v537 = vadd.f32 %v382, %v515
    %v538 = vadd.f32 %v387, %v520
    %v539 = vadd.f32 %v390, %v523
    %v540 = vadd.f32 %v395, %v528
    %v541 = vadd.f32 %v398, %v531
    %v543 = vshrl.u32 %v405, 16
    %v545 = vrot.slane %v543, 4
    %v546 = vshll.u32 %v405, 16
    %v548 = vrot.slane %v546, 5
    %v549 = vor.u32 %v545, %v548
    %v550 = vrot.slane %v549, 4
    %v552 = vshll.u32 %v406, 16
    %v554 = vrot.slane %v552, 5
    %v555 = vsel %vm73, %v550, %v554
    %v557 = vshrl.u32 %v407, 16
    %v559 = vrot.slane %v557, 4
    %v560 = vshll.u32 %v407, 16
    %v562 = vrot.slane %v560, 5
    %v563 = vor.u32 %v559, %v562
    %v564 = vrot.slane %v563, 4
    %v566 = vshll.u32 %v408, 16
    %v568 = vrot.slane %v566, 5
    %v569 = vsel %vm73, %v564, %v568
    %v571 = vshrl.u32 %v409, 16
    %v573 = vrot.slane %v571, 4
    %v574 = vshll.u32 %v409, 16
    %v576 = vrot.slane %v574, 5
    %v577 = vor.u32 %v573, %v576
    %v578 = vrot.slane %v577, 4
    %v580 = vshll.u32 %v410, 16
    %v582 = vrot.slane %v580, 5
    %v583 = vsel %vm73, %v578, %v582
    %v585 = vshrl.u32 %v411, 16
    %v587 = vrot.slane %v585, 4
    %v588 = vshll.u32 %v411, 16
    %v590 = vrot.slane %v588, 5
    %v591 = vor.u32 %v587, %v590
    %v592 = vrot.slane %v591, 4
    %v594 = vshll.u32 %v412, 16
    %v596 = vrot.slane %v594, 5
    %v597 = vsel %vm73, %v592, %v596
    %v599 = vshrl.u32 %v413, 16
    %v601 = vrot.slane %v599, 4
    %v602 = vshll.u32 %v413, 16
    %v604 = vrot.slane %v602, 5
    %v605 = vor.u32 %v601, %v604
    %v606 = vrot.slane %v605, 4
    %v608 = vshll.u32 %v414, 16
    %v610 = vrot.slane %v608, 5
    %v611 = vsel %vm73, %v606, %v610
    %v613 = vshrl.u32 %v415, 16
    %v615 = vrot.slane %v613, 4
    %v616 = vshll.u32 %v415, 16
    %v618 = vrot.slane %v616, 5
    %v619 = vor.u32 %v615, %v618
    %v620 = vrot.slane %v619, 4
    %v622 = vshll.u32 %v416, 16
    %v624 = vrot.slane %v622, 5
    %v625 = vsel %vm73, %v620, %v624
    %v627 = vshrl.u32 %v417, 16
    %v629 = vrot.slane %v627, 4
    %v630 = vshll.u32 %v417, 16
    %v632 = vrot.slane %v630, 5
    %v633 = vor.u32 %v629, %v632
    %v634 = vrot.slane %v633, 4
    %v636 = vshll.u32 %v418, 16
    %v638 = vrot.slane %v636, 5
    %v639 = vsel %vm73, %v634, %v638
    %v641 = vshrl.u32 %v419, 16
    %v643 = vrot.slane %v641, 4
    %v644 = vshll.u32 %v419, 16
    %v646 = vrot.slane %v644, 5
    %v647 = vor.u32 %v643, %v646
    %v648 = vrot.slane %v647, 4
    %v650 = vshll.u32 %v420, 16
    %v652 = vrot.slane %v650, 5
    %v653 = vsel %vm73, %v648, %v652
    %v654 = vld [vmem:[#allocation5 + $0x30] sm:$0xf]
    %v655 = vld [vmem:[#allocation5 + $0x34] sm:$0xf]
    %v656 = vld [vmem:[#allocation5 + $0x38] sm:$0xf]
    %v657 = vld [vmem:[#allocation5 + $0x3c] sm:$0xf]
    %v658 = vunpack.c.l.b16 %v555
    %v659 = vunpack.c.l.b16 %v569
    %v660 = vunpack.c.l.b16 %v583
    %v661 = vunpack.c.l.b16 %v597
    %v662 = vunpack.c.l.b16 %v611
    %v663 = vunpack.c.l.b16 %v625
    %v664 = vunpack.c.l.b16 %v639
    %v665 = vunpack.c.l.b16 %v653
    %v666 = vpack.c.b16 %v659, %v658
    %v667 = vpack.c.b16 %v661, %v660
    %v668 = vpack.c.b16 %v663, %v662
    %v669 = vpack.c.b16 %v665, %v664
    %v674 = vunpack.c.l.b16 %v654
    %v675 = vunpack.c.l.b16 %v655
    %v676 = vunpack.c.l.b16 %v656
    %v677 = vunpack.c.l.b16 %v657
    %v678 = vpack.c.b16 %v675, %v674
    %v679 = vpack.c.b16 %v677, %v676
    %v683 = vsel %vm214, %v666, 0
    %v686 = vsel %vm214, %v667, 0
    %v689 = vsel %vm214, %v668, 0
    %v692 = vsel %vm214, %v669, 0
    %694 = vmatprep.subr.bf16.mxu0 0
    %695 = vmatpush1.bf16.msra.mxu0 %v678
    %696 = vmatprep.subr.bf16.mxu0 0
    %697 = vmatpush1.bf16.msra.mxu0 %v679
    %698 = vmatprep.subr.bf16.mxu0 0
    %699 = vmatpush1.bf16.msra.mxu0 0
    %700 = vmatprep.subr.bf16.mxu0 0
    %701 = vmatpush1.bf16.msra.mxu0 0
    %702 = vmatprep.subr.bf16.mxu0 0
    %703 = vmatpush1.bf16.msra.mxu0 0
    %704 = vmatprep.subr.bf16.mxu0 0
    %705 = vmatpush1.bf16.msra.mxu0 0
    %706 = vmatprep.subr.bf16.mxu0 0
    %707 = vmatpush1.bf16.msra.mxu0 0
    %708 = vmatprep.subr.bf16.mxu0 0
    %709 = vmatpush1.bf16.msra.mxu0 0
    %710 = vmatprep.subr.bf16.mxu0 0
    %711 = vmatpush1.bf16.msra.mxu0 0
    %712 = vmatprep.subr.bf16.mxu0 0
    %713 = vmatpush1.bf16.msra.mxu0 0
    %714 = vmatprep.subr.bf16.mxu0 0
    %715 = vmatpush1.bf16.msra.mxu0 0
    %716 = vmatprep.subr.bf16.mxu0 0
    %717 = vmatpush1.bf16.msra.mxu0 0
    %718 = vmatprep.subr.bf16.mxu0 0
    %719 = vmatpush1.bf16.msra.mxu0 0
    %720 = vmatprep.subr.bf16.mxu0 0
    %721 = vmatpush1.bf16.msra.mxu0 0
    %722 = vmatprep.subr.bf16.mxu0 0
    %723 = vmatpush1.bf16.msra.mxu0 0
    %724 = vmatprep.subr.bf16.mxu0 0
    %725 = vmatpush1.bf16.msra.mxu0 0
    %726 = vmatprep.mubr.bf16.mxu0 0
    %727 = vmatmul.mubr.bf16.gmra.mrb[0].mxu0 %v683
    %v728 = vpop.f32.mrb[0].mxu0
    %v729 = vadd.f32 0.0, %v728
    %v730 = vpop.f32.mrb[0].mxu0
    %v731 = vpop.f32.mrb[0].mxu0
    %v732 = vadd.f32 0.0, %v731
    %v733 = vpop.f32.mrb[0].mxu0
    %734 = vmatprep.mubr.bf16.mxu0 0
    %735 = vmatmul.mubr.bf16.gmra.mrb[0].mxu0 %v686
    %v736 = vpop.f32.mrb[0].mxu0
    %v737 = vadd.f32 0.0, %v736
    %v738 = vpop.f32.mrb[0].mxu0
    %v739 = vpop.f32.mrb[0].mxu0
    %v740 = vadd.f32 0.0, %v739
    %v741 = vpop.f32.mrb[0].mxu0
    %742 = vmatprep.mubr.bf16.mxu0 0
    %743 = vmatmul.mubr.bf16.gmra.mrb[0].mxu0 %v689
    %v744 = vpop.f32.mrb[0].mxu0
    %v745 = vadd.f32 0.0, %v744
    %v746 = vpop.f32.mrb[0].mxu0
    %v747 = vpop.f32.mrb[0].mxu0
    %v748 = vadd.f32 0.0, %v747
    %v749 = vpop.f32.mrb[0].mxu0
    %750 = vmatprep.mubr.bf16.mxu0 0
    %751 = vmatmul.mubr.bf16.gmra.mrb[0].mxu0 %v692
    %v752 = vpop.f32.mrb[0].mxu0
    %v753 = vadd.f32 0.0, %v752
    %v754 = vpop.f32.mrb[0].mxu0
    %v755 = vpop.f32.mrb[0].mxu0
    %v756 = vadd.f32 0.0, %v755
    %v757 = vpop.f32.mrb[0].mxu0
    %758 = vdwg.mxu0
    %v759 = vadd.f32 %v534, %v729
    %v760 = vadd.f32 %v535, %v732
    %v761 = vadd.f32 %v536, %v737
    %v762 = vadd.f32 %v537, %v740
    %v763 = vadd.f32 %v538, %v745
    %v764 = vadd.f32 %v539, %v748
    %v765 = vadd.f32 %v540, %v753
    %v766 = vadd.f32 %v541, %v756
    %v767 = vld [vmem:[%s2] sm:$0x1]
    %v769 = vlaneseq
    %v770 = vshrl.u32 %v769, 7
    %v771 = vsub.s32 0, %v770
    %v772 = vrot.slane %v767, %v771
    %v774 = vmul.f32 %v759, %v772
    %v775 = vmul.f32 %v760, %v772
    %v776 = vmul.f32 %v761, %v772
    %v777 = vmul.f32 %v762, %v772
    %v778 = vmul.f32 %v763, %v772
    %v779 = vmul.f32 %v764, %v772
    %v780 = vmul.f32 %v765, %v772
    %v781 = vmul.f32 %v766, %v772
    %v782 = vld [vmem:[%s3] sm:$0x1]
    %v784 = vlaneseq
    %v785 = vshrl.u32 %v784, 7
    %v786 = vsub.s32 0, %v785
    %v787 = vrot.slane %v782, %v786
    %v789 = vadd.f32 %v774, %v787
    %v790 = vadd.f32 %v775, %v787
    %v791 = vadd.f32 %v776, %v787
    %v792 = vadd.f32 %v777, %v787
    %v793 = vadd.f32 %v778, %v787
    %v794 = vadd.f32 %v779, %v787
    %v795 = vadd.f32 %v780, %v787
    %v796 = vadd.f32 %v781, %v787
    %797 = vst [vmem:[#allocation7] sm:$0xff] %v789
    %798 = vst [vmem:[#allocation7 + $0x8] sm:$0xff] %v790
    %799 = vst [vmem:[#allocation7 + $0x10] sm:$0xff] %v791
    %800 = vst [vmem:[#allocation7 + $0x18] sm:$0xff] %v792
    %801 = vst [vmem:[#allocation7 + $0x20] sm:$0xff] %v793
    %802 = vst [vmem:[#allocation7 + $0x28] sm:$0xff] %v794
    %803 = vst [vmem:[#allocation7 + $0x30] sm:$0xff] %v795
    %804 = vst [vmem:[#allocation7 + $0x38] sm:$0xff] %v796
    // Predicated region
    $region26: #{tpu_custom_call.1} parent=1 // pred_check
      _
    $region27: #{tpu_custom_call.1} parent=1 // pred_check_branch
      %806 = sbr.rel (0) target = $region29
    $region28: #{tpu_custom_call.1} parent=1 // pred_region
      %s808 = ssub.s32 1024, 1024
      %809 = vsyncadd [#allocation4], %s808
      %s810 = sshll.u32 [#allocation7], 4
      %s811 = int_to_ptr.vmem [resolvable:$true] %s810
      %816 = dma.vmem_to_hbm [thread:$0]  %s811, 1024, %s4, [#allocation4], 128, 128, 8
    $region29: #{tpu_custom_call.1} parent=1 // pred_fallthru
      _
    // Predicated region
    $region30: #{tpu_custom_call.1} parent=1 // pred_check
      _
    $region31: #{tpu_custom_call.1} parent=1 // pred_check_branch
      %818 = sbr.rel (0) target = $region33
    $region32: #{tpu_custom_call.1} parent=1 // pred_region
      %819 = dma.done [#allocation4], 1024
    $region33: #{tpu_custom_call.1} parent=1 // pred_fallthru
      _
    %820 = vsyncpa [#allocation3], 1
    %821 = vsyncpa [#allocation6], 1
    %822 = vsyncpa [#allocation4], 1

</llo_original>
